<compile_context>
chip_gen: v5e
topology: v5e:2x2
jax: 0.10.0
libtpu: 0.0.40
codegen_flags: <defaults>
</compile_context>

<pallas_src>
import functools
import math

import jax
import jax.numpy as jnp
import numpy as np
from jax.experimental import pallas as pl
from jax.experimental.pallas import tpu as pltpu

PRIMES = (73856093, 19349663, 83492791)


def _hash_encoding_kernel(res_ref, x_ref, tab_ref, out_ref, *,
                          hash_mask, chunk, n_feat):
    """One grid step == (one hash-grid level, one tile of points).

    res_ref : SMEM int32 [L]                    (resolution - 1, scalar-prefetched)
    x_ref   : VMEM f32   [3, TN]                (coords-major, lane-dense over points)
    tab_ref : VMEM f32   [1, T//chunk, 8, chunk] (packed table: [.., feature, entry])
    out_ref : VMEM f32   [1, F, TN]             (lane-dense over points)
    """
    level = pl.program_id(0)
    res_m1_i = res_ref[level]                       # int32 scalar: resolution - 1
    res_m1_f = res_m1_i.astype(jnp.float32)

    x = jnp.clip(x_ref[...], 0.0, 1.0)              # (3, TN)
    scaled = x * res_m1_f
    floor_i = jnp.floor(scaled).astype(jnp.int32)
    ceil_i = jnp.clip(floor_i + 1, 0, res_m1_i)
    floor_i = jnp.clip(floor_i, 0, res_m1_i)
    w = scaled - floor_i.astype(jnp.float32)        # (3, TN)

    fx, fy, fz = floor_i[0:1], floor_i[1:2], floor_i[2:3]   # (1, TN) each
    cx, cy, cz = ceil_i[0:1], ceil_i[1:2], ceil_i[2:3]
    w0, w1, w2 = w[0:1], w[1:2], w[2:3]

    def hsh(a, b, c):
        # exact: 2**log2_hashmap_size divides 2**32 -> int32 wraparound is fine
        h = (a * jnp.int32(PRIMES[0])
             + b * jnp.int32(PRIMES[1])
             + c * jnp.int32(PRIMES[2]))
        return jnp.bitwise_and(h, jnp.int32(hash_mask))     # (1, TN)

    # Corner order identical to the PyTorch dx,dy,dz-nested loop.
    corner_h = []
    for dx in (0, 1):
        for dy in (0, 1):
            for dz in (0, 1):
                corner_h.append(hsh(cx if dx else fx,
                                    cy if dy else fy,
                                    cz if dz else fz))

    # Weight order applied by position, exactly as in the PyTorch forward
    # (this pairing is intentionally NOT standard trilinear order).
    u0, u1, u2 = 1.0 - w0, 1.0 - w1, 1.0 - w2
    corner_w = [u0 * u1 * u2, w0 * u1 * u2, u0 * w1 * u2, w0 * w1 * u2,
                u0 * u1 * w2, w0 * u1 * w2, u0 * w1 * w2, w0 * w1 * w2]

    tn = x.shape[1]
    n_chunks = tab_ref.shape[1]
    # Hoisted: built once per kernel invocation (not per corner / per chunk).
    iota_c = jax.lax.broadcasted_iota(jnp.int32, (chunk, tn), 0)

    def chunk_body(c, acc):
        off = c * chunk
        # Fused weighted one-hot: S[t - off, n] = sum_corners w_c[n] * [h_c[n] == t]
        s = jnp.zeros((chunk, tn), jnp.float32)
        for h, wc in zip(corner_h, corner_w):
            hit = iota_c == (h - off)               # (chunk, TN), sublane-broadcast of h
            s = s + jnp.where(hit, wc, 0.0)         # lane-dense accumulate of weights
        tab_chunk = tab_ref[0, c]                   # (8, chunk): rows = features (padded)
        return acc + jnp.dot(tab_chunk, s, preferred_element_type=jnp.float32)

    acc = jax.lax.fori_loop(0, n_chunks, chunk_body,
                            jnp.zeros((8, tn), jnp.float32))
    out_ref[0] = acc[:n_feat].astype(out_ref.dtype)


def improved_hash_encoding(x, tables, resolutions, log2_hashmap_size, *,
                           tile_n=128, chunk=128):
    """x: [N, 3] f32 in [0,1]; tables: [L, T, F] f32.  Returns [N, L*F]."""
    n_pts = x.shape[0]
    n_levels, n_tab, n_feat = tables.shape
    assert n_feat <= 8

    chunk = min(chunk, n_tab)
    assert n_tab % chunk == 0
    n_chunks = n_tab // chunk

    # Coords-major, lane-padded points: (3, N) -> (3, n_pad)
    n_pad = ((n_pts + tile_n - 1) // tile_n) * tile_n
    xt = jnp.zeros((3, n_pad), jnp.float32).at[:, :n_pts].set(
        x.astype(jnp.float32).T)

    # Repack tables lane-dense: (L, T, F) -> (L, T//chunk, 8, chunk) with
    # packed[l, c, f, j] == tables[l, c*chunk + j, f]  (features padded to 8 rows).
    tab_t = jnp.transpose(tables.astype(jnp.float32), (0, 2, 1))      # (L, F, T)
    tab_p = jnp.zeros((n_levels, 8, n_tab), jnp.float32).at[:, :n_feat, :].set(tab_t)
    tab_p = tab_p.reshape(n_levels, 8, n_chunks, chunk).transpose(0, 2, 1, 3)

    res_m1 = jnp.asarray([r - 1 for r in resolutions], dtype=jnp.int32)

    kernel = functools.partial(_hash_encoding_kernel,
                               hash_mask=(1 << log2_hashmap_size) - 1,
                               chunk=chunk, n_feat=n_feat)

    n_tiles = n_pad // tile_n
    out_lfn = pl.pallas_call(
        kernel,
        out_shape=jax.ShapeDtypeStruct((n_levels, n_feat, n_pad), jnp.float32),
        grid_spec=pltpu.PrefetchScalarGridSpec(
            num_scalar_prefetch=1,
            grid=(n_levels, n_tiles),
            in_specs=[
                pl.BlockSpec((3, tile_n), lambda l, i, res: (0, i)),
                pl.BlockSpec((1, n_chunks, 8, chunk), lambda l, i, res: (l, 0, 0, 0)),
            ],
            out_specs=pl.BlockSpec((1, n_feat, tile_n), lambda l, i, res: (l, 0, i)),
        ),
        compiler_params=pltpu.CompilerParams(
            dimension_semantics=("parallel", "parallel"),
            vmem_limit_bytes=32 * 1024 * 1024,
        ),
    )(res_m1, xt, tab_p)

    # (L, F, n_pad) -> (n_pad, L, F) -> (N, L*F)  == torch.cat(features, dim=1)
    out = jnp.transpose(out_lfn, (2, 0, 1)).reshape(n_pad, n_levels * n_feat)
    return out[:n_pts]


def reference_hash_encoding(x, tables, resolutions, log2_hashmap_size):
    """Pure-JAX reference mirroring the PyTorch forward."""
    mask = (1 << log2_hashmap_size) - 1
    x = jnp.clip(x, 0.0, 1.0)
    outs = []
    for level, res in enumerate(resolutions):
        scaled = x * float(res - 1)
        floor_i = jnp.floor(scaled).astype(jnp.int32)
        ceil_i = jnp.clip(floor_i + 1, 0, res - 1)
        floor_i = jnp.clip(floor_i, 0, res - 1)
        w = scaled - floor_i.astype(jnp.float32)

        def hsh(c):
            c = jnp.clip(c, 0, 2 ** 20)
            h = (c[:, 0] * jnp.int32(PRIMES[0])
                 + c[:, 1] * jnp.int32(PRIMES[1])
                 + c[:, 2] * jnp.int32(PRIMES[2]))
            return jnp.bitwise_and(h, jnp.int32(mask))

        cf = []
        for dx in (0, 1):
            for dy in (0, 1):
                for dz in (0, 1):
                    cc = jnp.stack(
                        [floor_i[:, 0] if dx == 0 else ceil_i[:, 0],
                         floor_i[:, 1] if dy == 0 else ceil_i[:, 1],
                         floor_i[:, 2] if dz == 0 else ceil_i[:, 2]], axis=1)
                    cf.append(tables[level][hsh(cc)])

        w0, w1, w2 = w[:, 0:1], w[:, 1:2], w[:, 2:3]
        interp = (cf[0] * (1 - w0) * (1 - w1) * (1 - w2)
                  + cf[1] * w0 * (1 - w1) * (1 - w2)
                  + cf[2] * (1 - w0) * w1 * (1 - w2)
                  + cf[3] * w0 * w1 * (1 - w2)
                  + cf[4] * (1 - w0) * (1 - w1) * w2
                  + cf[5] * w0 * (1 - w1) * w2
                  + cf[6] * (1 - w0) * w1 * w2
                  + cf[7] * w0 * w1 * w2)
        outs.append(interp)
    return jnp.concatenate(outs, axis=1)


if __name__ == "__main__":
    # Module hyperparameters (small hashmap so the demo table fits VMEM).
    n_levels = 16
    n_features_per_level = 2
    log2_hashmap_size = 12          # demo-sized table: 4096 entries per level
    base_resolution = 16
    finest_resolution = 512
    n_points = 128

    b = math.exp((math.log(finest_resolution) - math.log(base_resolution))
                 / max(1, n_levels - 1))
    resolutions = [min(int(base_resolution * b ** level), finest_resolution)
                   for level in range(n_levels)]

    key = jax.random.PRNGKey(0)
    k_x, k_tab = jax.random.split(key)

    # Input points in [0, 1]^3.
    x = jax.random.uniform(k_x, (n_points, 3), dtype=jnp.float32)

    # Deterministic xavier_uniform_(gain=1e-4)-style init for each (T, F) table.
    T = 2 ** log2_hashmap_size
    F = n_features_per_level
    gain = 1e-4
    bound = gain * math.sqrt(6.0 / (T + F))
    tables = jax.random.uniform(k_tab, (n_levels, T, F), dtype=jnp.float32,
                                minval=-bound, maxval=bound)

    out = jax.block_until_ready(
        improved_hash_encoding(x, tables, resolutions, log2_hashmap_size))
    ref = jax.block_until_ready(
        reference_hash_encoding(x, tables, resolutions, log2_hashmap_size))

    assert out.shape == (n_points, n_levels * n_features_per_level), out.shape
    # atol covers MXU multi-pass f32 rounding in the fused weighted matmul
    # (table values are ~1e-6 in magnitude); structural errors are >> 1e-7.
    np.testing.assert_allclose(np.asarray(out), np.asarray(ref),
                               rtol=1e-4, atol=1e-7)

    print("KERNEL_OK")
</pallas_src>

<mosaic_0001>
module attributes {stable_mosaic.version = 11 : i64} {
  func.func @_hash_encoding_kernel(%arg0: i32, %arg1: i32, %arg2: memref<16xi32, #tpu.memory_space<smem>>, %arg3: memref<3x128xf32, #tpu.memory_space<vmem>>, %arg4: memref<1x32x8x128xf32, #tpu.memory_space<vmem>>, %arg5: memref<1x2x128xf32, #tpu.memory_space<vmem>>) attributes {dimension_semantics = [#tpu.dimension_semantics<parallel>, #tpu.dimension_semantics<parallel>], iteration_bounds = array<i64: 16, 1>, scalar_prefetch = 1 : i64, scratch_operands = 0 : i64, tpu.core_type = #tpu.core_type<tc>, window_params = [{transform_indices = @transform_0, window_bounds = array<i64: 3, 128>}, {transform_indices = @transform_1, window_bounds = array<i64: 1, 32, 8, 128>}, {transform_indices = @transform_2, window_bounds = array<i64: 1, 2, 128>}]} {
    %0 = arith.index_cast %arg0 : i32 to index
    %1 = memref.load %arg2[%0] : memref<16xi32, #tpu.memory_space<smem>>
    %2 = arith.sitofp %1 : i32 to f32
    %c0 = arith.constant 0 : index
    %c0_0 = arith.constant 0 : index
    %3 = vector.load %arg3[%c0, %c0_0] : memref<3x128xf32, #tpu.memory_space<vmem>>, vector<3x128xf32>
    %cst = arith.constant 0.000000e+00 : f32
    %cst_1 = arith.constant 1.000000e+00 : f32
    %4 = vector.broadcast %cst : f32 to vector<3x128xf32>
    %5 = arith.maximumf %4, %3 : vector<3x128xf32>
    %6 = vector.broadcast %cst_1 : f32 to vector<3x128xf32>
    %7 = arith.minimumf %6, %5 : vector<3x128xf32>
    %8 = vector.broadcast %2 : f32 to vector<3x128xf32>
    %9 = arith.mulf %7, %8 : vector<3x128xf32>
    %10 = math.floor %9 : vector<3x128xf32>
    %11 = arith.fptosi %10 : vector<3x128xf32> to vector<3x128xi32>
    %c1_i32 = arith.constant 1 : i32
    %12 = vector.broadcast %c1_i32 : i32 to vector<3x128xi32>
    %13 = arith.addi %11, %12 : vector<3x128xi32>
    %c0_i32 = arith.constant 0 : i32
    %14 = vector.broadcast %c0_i32 : i32 to vector<3x128xi32>
    %15 = arith.maxsi %14, %13 : vector<3x128xi32>
    %16 = vector.broadcast %1 : i32 to vector<3x128xi32>
    %17 = arith.minsi %16, %15 : vector<3x128xi32>
    %c0_i32_2 = arith.constant 0 : i32
    %18 = vector.broadcast %c0_i32_2 : i32 to vector<3x128xi32>
    %19 = arith.maxsi %18, %11 : vector<3x128xi32>
    %20 = vector.broadcast %1 : i32 to vector<3x128xi32>
    %21 = arith.minsi %20, %19 : vector<3x128xi32>
    %22 = arith.sitofp %21 : vector<3x128xi32> to vector<3x128xf32>
    %23 = arith.subf %9, %22 : vector<3x128xf32>
    %24 = vector.extract_strided_slice %21 {offsets = [0, 0], sizes = [1, 128], strides = [1, 1]} : vector<3x128xi32> to vector<1x128xi32>
    %25 = vector.extract_strided_slice %21 {offsets = [1, 0], sizes = [1, 128], strides = [1, 1]} : vector<3x128xi32> to vector<1x128xi32>
    %26 = vector.extract_strided_slice %21 {offsets = [2, 0], sizes = [1, 128], strides = [1, 1]} : vector<3x128xi32> to vector<1x128xi32>
    %27 = vector.extract_strided_slice %17 {offsets = [0, 0], sizes = [1, 128], strides = [1, 1]} : vector<3x128xi32> to vector<1x128xi32>
    %28 = vector.extract_strided_slice %17 {offsets = [1, 0], sizes = [1, 128], strides = [1, 1]} : vector<3x128xi32> to vector<1x128xi32>
    %29 = vector.extract_strided_slice %17 {offsets = [2, 0], sizes = [1, 128], strides = [1, 1]} : vector<3x128xi32> to vector<1x128xi32>
    %30 = vector.extract_strided_slice %23 {offsets = [0, 0], sizes = [1, 128], strides = [1, 1]} : vector<3x128xf32> to vector<1x128xf32>
    %31 = vector.extract_strided_slice %23 {offsets = [1, 0], sizes = [1, 128], strides = [1, 1]} : vector<3x128xf32> to vector<1x128xf32>
    %32 = vector.extract_strided_slice %23 {offsets = [2, 0], sizes = [1, 128], strides = [1, 1]} : vector<3x128xf32> to vector<1x128xf32>
    %c73856093_i32 = arith.constant 73856093 : i32
    %33 = vector.broadcast %c73856093_i32 : i32 to vector<1x128xi32>
    %34 = arith.muli %24, %33 : vector<1x128xi32>
    %c19349663_i32 = arith.constant 19349663 : i32
    %35 = vector.broadcast %c19349663_i32 : i32 to vector<1x128xi32>
    %36 = arith.muli %25, %35 : vector<1x128xi32>
    %37 = arith.addi %34, %36 : vector<1x128xi32>
    %c83492791_i32 = arith.constant 83492791 : i32
    %38 = vector.broadcast %c83492791_i32 : i32 to vector<1x128xi32>
    %39 = arith.muli %26, %38 : vector<1x128xi32>
    %40 = arith.addi %37, %39 : vector<1x128xi32>
    %c4095_i32 = arith.constant 4095 : i32
    %41 = vector.broadcast %c4095_i32 : i32 to vector<1x128xi32>
    %42 = arith.andi %40, %41 : vector<1x128xi32>
    %c73856093_i32_3 = arith.constant 73856093 : i32
    %43 = vector.broadcast %c73856093_i32_3 : i32 to vector<1x128xi32>
    %44 = arith.muli %24, %43 : vector<1x128xi32>
    %c19349663_i32_4 = arith.constant 19349663 : i32
    %45 = vector.broadcast %c19349663_i32_4 : i32 to vector<1x128xi32>
    %46 = arith.muli %25, %45 : vector<1x128xi32>
    %47 = arith.addi %44, %46 : vector<1x128xi32>
    %c83492791_i32_5 = arith.constant 83492791 : i32
    %48 = vector.broadcast %c83492791_i32_5 : i32 to vector<1x128xi32>
    %49 = arith.muli %29, %48 : vector<1x128xi32>
    %50 = arith.addi %47, %49 : vector<1x128xi32>
    %c4095_i32_6 = arith.constant 4095 : i32
    %51 = vector.broadcast %c4095_i32_6 : i32 to vector<1x128xi32>
    %52 = arith.andi %50, %51 : vector<1x128xi32>
    %c73856093_i32_7 = arith.constant 73856093 : i32
    %53 = vector.broadcast %c73856093_i32_7 : i32 to vector<1x128xi32>
    %54 = arith.muli %24, %53 : vector<1x128xi32>
    %c19349663_i32_8 = arith.constant 19349663 : i32
    %55 = vector.broadcast %c19349663_i32_8 : i32 to vector<1x128xi32>
    %56 = arith.muli %28, %55 : vector<1x128xi32>
    %57 = arith.addi %54, %56 : vector<1x128xi32>
    %c83492791_i32_9 = arith.constant 83492791 : i32
    %58 = vector.broadcast %c83492791_i32_9 : i32 to vector<1x128xi32>
    %59 = arith.muli %26, %58 : vector<1x128xi32>
    %60 = arith.addi %57, %59 : vector<1x128xi32>
    %c4095_i32_10 = arith.constant 4095 : i32
    %61 = vector.broadcast %c4095_i32_10 : i32 to vector<1x128xi32>
    %62 = arith.andi %60, %61 : vector<1x128xi32>
    %c73856093_i32_11 = arith.constant 73856093 : i32
    %63 = vector.broadcast %c73856093_i32_11 : i32 to vector<1x128xi32>
    %64 = arith.muli %24, %63 : vector<1x128xi32>
    %c19349663_i32_12 = arith.constant 19349663 : i32
    %65 = vector.broadcast %c19349663_i32_12 : i32 to vector<1x128xi32>
    %66 = arith.muli %28, %65 : vector<1x128xi32>
    %67 = arith.addi %64, %66 : vector<1x128xi32>
    %c83492791_i32_13 = arith.constant 83492791 : i32
    %68 = vector.broadcast %c83492791_i32_13 : i32 to vector<1x128xi32>
    %69 = arith.muli %29, %68 : vector<1x128xi32>
    %70 = arith.addi %67, %69 : vector<1x128xi32>
    %c4095_i32_14 = arith.constant 4095 : i32
    %71 = vector.broadcast %c4095_i32_14 : i32 to vector<1x128xi32>
    %72 = arith.andi %70, %71 : vector<1x128xi32>
    %c73856093_i32_15 = arith.constant 73856093 : i32
    %73 = vector.broadcast %c73856093_i32_15 : i32 to vector<1x128xi32>
    %74 = arith.muli %27, %73 : vector<1x128xi32>
    %c19349663_i32_16 = arith.constant 19349663 : i32
    %75 = vector.broadcast %c19349663_i32_16 : i32 to vector<1x128xi32>
    %76 = arith.muli %25, %75 : vector<1x128xi32>
    %77 = arith.addi %74, %76 : vector<1x128xi32>
    %c83492791_i32_17 = arith.constant 83492791 : i32
    %78 = vector.broadcast %c83492791_i32_17 : i32 to vector<1x128xi32>
    %79 = arith.muli %26, %78 : vector<1x128xi32>
    %80 = arith.addi %77, %79 : vector<1x128xi32>
    %c4095_i32_18 = arith.constant 4095 : i32
    %81 = vector.broadcast %c4095_i32_18 : i32 to vector<1x128xi32>
    %82 = arith.andi %80, %81 : vector<1x128xi32>
    %c73856093_i32_19 = arith.constant 73856093 : i32
    %83 = vector.broadcast %c73856093_i32_19 : i32 to vector<1x128xi32>
    %84 = arith.muli %27, %83 : vector<1x128xi32>
    %c19349663_i32_20 = arith.constant 19349663 : i32
    %85 = vector.broadcast %c19349663_i32_20 : i32 to vector<1x128xi32>
    %86 = arith.muli %25, %85 : vector<1x128xi32>
    %87 = arith.addi %84, %86 : vector<1x128xi32>
    %c83492791_i32_21 = arith.constant 83492791 : i32
    %88 = vector.broadcast %c83492791_i32_21 : i32 to vector<1x128xi32>
    %89 = arith.muli %29, %88 : vector<1x128xi32>
    %90 = arith.addi %87, %89 : vector<1x128xi32>
    %c4095_i32_22 = arith.constant 4095 : i32
    %91 = vector.broadcast %c4095_i32_22 : i32 to vector<1x128xi32>
    %92 = arith.andi %90, %91 : vector<1x128xi32>
    %c73856093_i32_23 = arith.constant 73856093 : i32
    %93 = vector.broadcast %c73856093_i32_23 : i32 to vector<1x128xi32>
    %94 = arith.muli %27, %93 : vector<1x128xi32>
    %c19349663_i32_24 = arith.constant 19349663 : i32
    %95 = vector.broadcast %c19349663_i32_24 : i32 to vector<1x128xi32>
    %96 = arith.muli %28, %95 : vector<1x128xi32>
    %97 = arith.addi %94, %96 : vector<1x128xi32>
    %c83492791_i32_25 = arith.constant 83492791 : i32
    %98 = vector.broadcast %c83492791_i32_25 : i32 to vector<1x128xi32>
    %99 = arith.muli %26, %98 : vector<1x128xi32>
    %100 = arith.addi %97, %99 : vector<1x128xi32>
    %c4095_i32_26 = arith.constant 4095 : i32
    %101 = vector.broadcast %c4095_i32_26 : i32 to vector<1x128xi32>
    %102 = arith.andi %100, %101 : vector<1x128xi32>
    %c73856093_i32_27 = arith.constant 73856093 : i32
    %103 = vector.broadcast %c73856093_i32_27 : i32 to vector<1x128xi32>
    %104 = arith.muli %27, %103 : vector<1x128xi32>
    %c19349663_i32_28 = arith.constant 19349663 : i32
    %105 = vector.broadcast %c19349663_i32_28 : i32 to vector<1x128xi32>
    %106 = arith.muli %28, %105 : vector<1x128xi32>
    %107 = arith.addi %104, %106 : vector<1x128xi32>
    %c83492791_i32_29 = arith.constant 83492791 : i32
    %108 = vector.broadcast %c83492791_i32_29 : i32 to vector<1x128xi32>
    %109 = arith.muli %29, %108 : vector<1x128xi32>
    %110 = arith.addi %107, %109 : vector<1x128xi32>
    %c4095_i32_30 = arith.constant 4095 : i32
    %111 = vector.broadcast %c4095_i32_30 : i32 to vector<1x128xi32>
    %112 = arith.andi %110, %111 : vector<1x128xi32>
    %cst_31 = arith.constant 1.000000e+00 : f32
    %113 = vector.broadcast %cst_31 : f32 to vector<1x128xf32>
    %114 = arith.subf %113, %30 : vector<1x128xf32>
    %cst_32 = arith.constant 1.000000e+00 : f32
    %115 = vector.broadcast %cst_32 : f32 to vector<1x128xf32>
    %116 = arith.subf %115, %31 : vector<1x128xf32>
    %cst_33 = arith.constant 1.000000e+00 : f32
    %117 = vector.broadcast %cst_33 : f32 to vector<1x128xf32>
    %118 = arith.subf %117, %32 : vector<1x128xf32>
    %119 = arith.mulf %114, %116 : vector<1x128xf32>
    %120 = arith.mulf %119, %118 : vector<1x128xf32>
    %121 = arith.mulf %30, %116 : vector<1x128xf32>
    %122 = arith.mulf %121, %118 : vector<1x128xf32>
    %123 = arith.mulf %114, %31 : vector<1x128xf32>
    %124 = arith.mulf %123, %118 : vector<1x128xf32>
    %125 = arith.mulf %30, %31 : vector<1x128xf32>
    %126 = arith.mulf %125, %118 : vector<1x128xf32>
    %127 = arith.mulf %114, %116 : vector<1x128xf32>
    %128 = arith.mulf %127, %32 : vector<1x128xf32>
    %129 = arith.mulf %30, %116 : vector<1x128xf32>
    %130 = arith.mulf %129, %32 : vector<1x128xf32>
    %131 = arith.mulf %114, %31 : vector<1x128xf32>
    %132 = arith.mulf %131, %32 : vector<1x128xf32>
    %133 = arith.mulf %30, %31 : vector<1x128xf32>
    %134 = arith.mulf %133, %32 : vector<1x128xf32>
    %135 = tpu.iota {dimensions = array<i32: 0>} : vector<128x128xi32>
    %cst_34 = arith.constant 0.000000e+00 : f32
    %136 = vector.broadcast %cst_34 : f32 to vector<8x128xf32>
    %c0_i32_35 = arith.constant 0 : i32
    %c32_i32 = arith.constant 32 : i32
    %137 = arith.addi %c0_i32_35, %c32_i32 : i32
    %c1_i32_36 = arith.constant 1 : i32
    %138 = scf.for %arg6 = %c0_i32_35 to %137 step %c1_i32_36 iter_args(%arg7 = %136) -> (vector<8x128xf32>)  : i32 {
      %c128_i32 = arith.constant 128 : i32
      %143 = arith.muli %arg6, %c128_i32 : i32
      %cst_41 = arith.constant 0.000000e+00 : f32
      %144 = vector.broadcast %cst_41 : f32 to vector<128x128xf32>
      %145 = vector.broadcast %143 : i32 to vector<1x128xi32>
      %146 = arith.subi %42, %145 : vector<1x128xi32>
      %147 = vector.broadcast %146 : vector<1x128xi32> to vector<128x128xi32>
      %148 = arith.cmpi eq, %135, %147 : vector<128x128xi32>
      %cst_42 = arith.constant 0.000000e+00 : f32
      %149 = vector.shape_cast %120 : vector<1x128xf32> to vector<1x128xf32>
      %150 = vector.broadcast %149 : vector<1x128xf32> to vector<128x128xf32>
      %151 = vector.broadcast %cst_42 : f32 to vector<128x128xf32>
      %152 = arith.select %148, %150, %151 : vector<128x128xi1>, vector<128x128xf32>
      %153 = arith.addf %144, %152 : vector<128x128xf32>
      %154 = vector.broadcast %143 : i32 to vector<1x128xi32>
      %155 = arith.subi %52, %154 : vector<1x128xi32>
      %156 = vector.broadcast %155 : vector<1x128xi32> to vector<128x128xi32>
      %157 = arith.cmpi eq, %135, %156 : vector<128x128xi32>
      %cst_43 = arith.constant 0.000000e+00 : f32
      %158 = vector.shape_cast %122 : vector<1x128xf32> to vector<1x128xf32>
      %159 = vector.broadcast %158 : vector<1x128xf32> to vector<128x128xf32>
      %160 = vector.broadcast %cst_43 : f32 to vector<128x128xf32>
      %161 = arith.select %157, %159, %160 : vector<128x128xi1>, vector<128x128xf32>
      %162 = arith.addf %153, %161 : vector<128x128xf32>
      %163 = vector.broadcast %143 : i32 to vector<1x128xi32>
      %164 = arith.subi %62, %163 : vector<1x128xi32>
      %165 = vector.broadcast %164 : vector<1x128xi32> to vector<128x128xi32>
      %166 = arith.cmpi eq, %135, %165 : vector<128x128xi32>
      %cst_44 = arith.constant 0.000000e+00 : f32
      %167 = vector.shape_cast %124 : vector<1x128xf32> to vector<1x128xf32>
      %168 = vector.broadcast %167 : vector<1x128xf32> to vector<128x128xf32>
      %169 = vector.broadcast %cst_44 : f32 to vector<128x128xf32>
      %170 = arith.select %166, %168, %169 : vector<128x128xi1>, vector<128x128xf32>
      %171 = arith.addf %162, %170 : vector<128x128xf32>
      %172 = vector.broadcast %143 : i32 to vector<1x128xi32>
      %173 = arith.subi %72, %172 : vector<1x128xi32>
      %174 = vector.broadcast %173 : vector<1x128xi32> to vector<128x128xi32>
      %175 = arith.cmpi eq, %135, %174 : vector<128x128xi32>
      %cst_45 = arith.constant 0.000000e+00 : f32
      %176 = vector.shape_cast %126 : vector<1x128xf32> to vector<1x128xf32>
      %177 = vector.broadcast %176 : vector<1x128xf32> to vector<128x128xf32>
      %178 = vector.broadcast %cst_45 : f32 to vector<128x128xf32>
      %179 = arith.select %175, %177, %178 : vector<128x128xi1>, vector<128x128xf32>
      %180 = arith.addf %171, %179 : vector<128x128xf32>
      %181 = vector.broadcast %143 : i32 to vector<1x128xi32>
      %182 = arith.subi %82, %181 : vector<1x128xi32>
      %183 = vector.broadcast %182 : vector<1x128xi32> to vector<128x128xi32>
      %184 = arith.cmpi eq, %135, %183 : vector<128x128xi32>
      %cst_46 = arith.constant 0.000000e+00 : f32
      %185 = vector.shape_cast %128 : vector<1x128xf32> to vector<1x128xf32>
      %186 = vector.broadcast %185 : vector<1x128xf32> to vector<128x128xf32>
      %187 = vector.broadcast %cst_46 : f32 to vector<128x128xf32>
      %188 = arith.select %184, %186, %187 : vector<128x128xi1>, vector<128x128xf32>
      %189 = arith.addf %180, %188 : vector<128x128xf32>
      %190 = vector.broadcast %143 : i32 to vector<1x128xi32>
      %191 = arith.subi %92, %190 : vector<1x128xi32>
      %192 = vector.broadcast %191 : vector<1x128xi32> to vector<128x128xi32>
      %193 = arith.cmpi eq, %135, %192 : vector<128x128xi32>
      %cst_47 = arith.constant 0.000000e+00 : f32
      %194 = vector.shape_cast %130 : vector<1x128xf32> to vector<1x128xf32>
      %195 = vector.broadcast %194 : vector<1x128xf32> to vector<128x128xf32>
      %196 = vector.broadcast %cst_47 : f32 to vector<128x128xf32>
      %197 = arith.select %193, %195, %196 : vector<128x128xi1>, vector<128x128xf32>
      %198 = arith.addf %189, %197 : vector<128x128xf32>
      %199 = vector.broadcast %143 : i32 to vector<1x128xi32>
      %200 = arith.subi %102, %199 : vector<1x128xi32>
      %201 = vector.broadcast %200 : vector<1x128xi32> to vector<128x128xi32>
      %202 = arith.cmpi eq, %135, %201 : vector<128x128xi32>
      %cst_48 = arith.constant 0.000000e+00 : f32
      %203 = vector.shape_cast %132 : vector<1x128xf32> to vector<1x128xf32>
      %204 = vector.broadcast %203 : vector<1x128xf32> to vector<128x128xf32>
      %205 = vector.broadcast %cst_48 : f32 to vector<128x128xf32>
      %206 = arith.select %202, %204, %205 : vector<128x128xi1>, vector<128x128xf32>
      %207 = arith.addf %198, %206 : vector<128x128xf32>
      %208 = vector.broadcast %143 : i32 to vector<1x128xi32>
      %209 = arith.subi %112, %208 : vector<1x128xi32>
      %210 = vector.broadcast %209 : vector<1x128xi32> to vector<128x128xi32>
      %211 = arith.cmpi eq, %135, %210 : vector<128x128xi32>
      %cst_49 = arith.constant 0.000000e+00 : f32
      %212 = vector.shape_cast %134 : vector<1x128xf32> to vector<1x128xf32>
      %213 = vector.broadcast %212 : vector<1x128xf32> to vector<128x128xf32>
      %214 = vector.broadcast %cst_49 : f32 to vector<128x128xf32>
      %215 = arith.select %211, %213, %214 : vector<128x128xi1>, vector<128x128xf32>
      %216 = arith.addf %207, %215 : vector<128x128xf32>
      %c0_50 = arith.constant 0 : index
      %217 = arith.index_cast %arg6 : i32 to index
      %c0_51 = arith.constant 0 : index
      %c0_52 = arith.constant 0 : index
      %218 = vector.load %arg4[%c0_50, %217, %c0_51, %c0_52] : memref<1x32x8x128xf32, #tpu.memory_space<vmem>>, vector<1x1x8x128xf32>
      %219 = vector.shape_cast %218 : vector<1x1x8x128xf32> to vector<8x128xf32>
      %cst_53 = arith.constant dense<0.000000e+00> : vector<8x128xf32>
      %220 = tpu.matmul %219, %216, %cst_53 {dimension_numbers = #tpu.dot_dimension_numbers<[1], [0], [0], [1], [0, 0, 1, 1], [], []>} : vector<8x128xf32>, vector<128x128xf32>, vector<8x128xf32> -> vector<8x128xf32>
      %221 = arith.addf %arg7, %220 : vector<8x128xf32>
      scf.yield %221 : vector<8x128xf32>
    }
    %c32_i32_37 = arith.constant 32 : i32
    %139 = vector.extract_strided_slice %138 {offsets = [0, 0], sizes = [2, 128], strides = [1, 1]} : vector<8x128xf32> to vector<2x128xf32>
    %c0_38 = arith.constant 0 : index
    %c0_39 = arith.constant 0 : index
    %c0_40 = arith.constant 0 : index
    %140 = vector.load %arg5[%c0_38, %c0_39, %c0_40] : memref<1x2x128xf32, #tpu.memory_space<vmem>>, vector<1x2x128xf32>
    %141 = vector.shape_cast %140 : vector<1x2x128xf32> to vector<2x128xf32>
    %142 = vector.shape_cast %139 : vector<2x128xf32> to vector<1x2x128xf32>
    tpu.vector_store %arg5[%c0_38, %c0_39, %c0_40], %142 {strides = array<i32>} : memref<1x2x128xf32, #tpu.memory_space<vmem>>, vector<1x2x128xf32>,
    return
  }
  func.func @transform_0(%arg0: i32, %arg1: i32, %arg2: memref<16xi32, #tpu.memory_space<smem>>) -> (i32, i32) {
    %c0_i32 = arith.constant 0 : i32
    %c0_i32_0 = arith.constant 0 : i32
    return %c0_i32, %arg1 : i32, i32
  }
  func.func @transform_1(%arg0: i32, %arg1: i32, %arg2: memref<16xi32, #tpu.memory_space<smem>>) -> (i32, i32, i32, i32) {
    %c0_i32 = arith.constant 0 : i32
    %c0_i32_0 = arith.constant 0 : i32
    %c0_i32_1 = arith.constant 0 : i32
    %c0_i32_2 = arith.constant 0 : i32
    return %arg0, %c0_i32, %c0_i32_0, %c0_i32_1 : i32, i32, i32, i32
  }
  func.func @transform_2(%arg0: i32, %arg1: i32, %arg2: memref<16xi32, #tpu.memory_space<smem>>) -> (i32, i32, i32) {
    %c0_i32 = arith.constant 0 : i32
    %c0_i32_0 = arith.constant 0 : i32
    return %arg0, %c0_i32, %arg1 : i32, i32, i32
  }
}

</mosaic_0001>

<llo_original>
// kernel: tpu_custom_call.1
$region0: #{tpu_custom_call.1}
  #allocation0 [shape = 'u32[]', space=smem, size = 0x4, offset = 0x4, fixed_abs, tag = 'smem constant byte address 0x4 - core index']
  #allocation1 [shape = 'u32[72,128]{1,0:T(1,128)}', space=vmem, size = 0x9000, scoped, tag = 'internal scratch']
  #allocation2 [shape = 's32[1]{0}', space=sflag, size = 0x4, scoped, tag = 'scoped memory for tpu_custom_call.1']
  #allocation3 [shape = 'u8[512]{0}', space=smem, size = 0x200, scoped, tag = 'prefetched SMEM operand 0']
  %s0 = inlined_call_operand.hbm [shape: s32[16], index: 0, kind: input, shape index: {}]
  %s1 = inlined_call_operand.hbm [shape: f32[3,128], index: 1, kind: input, shape index: {}]
  %s2 = inlined_call_operand.hbm [shape: f32[16,32,8,128], index: 2, kind: input, shape index: {}]
  %s3 = inlined_call_operand.hbm [shape: f32[16,2,128], index: 3, kind: output, shape index: {}]
  %s4 = sld [smem:[#allocation0]]
  $region56: #{tpu_custom_call.1} parent=0
    _
  %s6 = ssub.s32 1, %s4
  %s7 = scalar_select 0, %s6, %s4
  %s9 = sshll.u32 %s0, 4
  %s10 = int_to_ptr.hbm [resolvable:$true] %s9
  %12 = dma.hbm_to_smem %s10, 16, [#allocation3], [#allocation2]
  %14 = dma.done [#allocation2], 16
  %15 = sfence
  $region1: #{tpu_custom_call.1} parent=0
    #allocation4 [shape = 'u8[2048]{0}', space=vmem, size = 0x800, scoped, tag = 'input window, operand 1, single buffered']
    #allocation5 [shape = 's32[2]{0}', space=sflag, size = 0x8, scoped, tag = 'scoped memory for tpu_custom_call.1']
    #allocation6 [shape = 's32[2]{0}', space=sflag, size = 0x8, scoped, tag = 'scoped memory for tpu_custom_call.1']
    #allocation7 [shape = 'u8[262144]{0}', space=vmem, size = 0x40000, scoped, tag = 'input window, operand 2']
    #allocation8 [shape = 's32[2]{0}', space=sflag, size = 0x8, scoped, tag = 'scoped memory for tpu_custom_call.1']
    #allocation9 [shape = 'u8[2048]{0}', space=vmem, size = 0x800, scoped, tag = 'output window, operand 0']
    %16 = vsyncpa [#allocation5], 0
    %17 = vsyncpa [#allocation8], 0
    %s18 = scalar_lea.sflag [#allocation8], 1
    %19 = vsyncpa %s18, 0
    %20 = vsyncpa [#allocation6], 0
    %s21 = scalar_lea.sflag [#allocation6], 1
    %22 = vsyncpa %s21, 0
    loop: start=0, step=1, limit=18
    $region2: #{tpu_custom_call.1} parent=1 // loop_pre_header
      _
    $region3: #{tpu_custom_call.1} parent=1 // loop_header
      %s24 = sphi 0, %s28
      %p25 = scmp.ge.s32.totalorder %s24, 18
      %s31 = sphi 0, %s43
      %s32 = sphi 0, %s39
      %s33 = sphi 0, %s31
      %s34 = sphi 0, %s32
      %s35 = sphi 0, %s33
      %s36 = sphi 0, %s34
      %s46 = sphi 0, %s48
      %s49 = sphi 0, %s46
      %s50 = sphi 0, %s49
      %s66 = sphi 0, %s50
      %s72 = sphi 0, %s74
      %s75 = sphi 0, %s72
      %s76 = sphi 0, %s75
      %s92 = sphi 0, %s76
      %s100 = sphi 0, %s102
      %s103 = sphi 0, %s100
      %s104 = sphi 0, %s103
      %s120 = sphi 0, %s104
    $region4: #{tpu_custom_call.1} parent=1 // loop_header_branch
      %27 = sbr.rel (%p25) target = $region8
    $region5: #{tpu_custom_call.1} parent=1 // loop_body
      %s29 = ssub.s32 %s24, 1
      %s30 = ssub.s32 %s24, 2
      %s37 = sadd.s32 1, %s32
      %p38 = scmp.ge.s32.totalorder %s37, 1
      %s39 = scalar_select %p38, 0, %s37
      %s40 = sadd.s32 1, %s31
      %s41 = scalar_select %p38, %s40, %s31
      %p42 = scmp.ge.s32.totalorder %s41, 16
      %s43 = scalar_select %p42, 0, %s41
      %s44 = ssub.s32 %s32, %s39
      %p45 = scmp.eq.s32.totalorder %s44, 0
      %s47 = sadd.s32 %s46, 1
      %s48 = scalar_select %p45, %s46, %s47
      %p51 = pneg %p45
      %p52 = scmp.eq.s32.totalorder %s24, 15
      %p53 = por %p51, %p52
      %p54 = scmp.ne.s32.totalorder %s46, %s49
      %p55 = scmp.eq.s32.totalorder %s24, 0
      %p56 = por %p54, %p55
      %p57 = scmp.ne.s32.totalorder %s46, %s49
      %p58 = scmp.eq.s32.totalorder %s29, 15
      %p59 = por %p57, %p58
      %p60 = scmp.ne.s32.totalorder %s49, %s50
      %p61 = scmp.eq.s32.totalorder %s29, 0
      %p62 = por %p60, %p61
      %p63 = scmp.ne.s32.totalorder %s49, %s50
      %p64 = scmp.eq.s32.totalorder %s30, 15
      %p65 = por %p63, %p64
      %p67 = scmp.ne.s32.totalorder %s50, %s66
      %p68 = scmp.eq.s32.totalorder %s30, 0
      %p69 = por %p67, %p68
      %s70 = ssub.s32 %s31, %s43
      %p71 = scmp.eq.s32.totalorder %s70, 0
      %s73 = sadd.s32 %s72, 1
      %s74 = scalar_select %p71, %s72, %s73
      %p77 = pneg %p71
      %p78 = scmp.eq.s32.totalorder %s24, 15
      %p79 = por %p77, %p78
      %p80 = scmp.ne.s32.totalorder %s72, %s75
      %p81 = scmp.eq.s32.totalorder %s24, 0
      %p82 = por %p80, %p81
      %p83 = scmp.ne.s32.totalorder %s72, %s75
      %p84 = scmp.eq.s32.totalorder %s29, 15
      %p85 = por %p83, %p84
      %p86 = scmp.ne.s32.totalorder %s75, %s76
      %p87 = scmp.eq.s32.totalorder %s29, 0
      %p88 = por %p86, %p87
      %p89 = scmp.ne.s32.totalorder %s75, %s76
      %p90 = scmp.eq.s32.totalorder %s30, 15
      %p91 = por %p89, %p90
      %p93 = scmp.ne.s32.totalorder %s76, %s92
      %p94 = scmp.eq.s32.totalorder %s30, 0
      %p95 = por %p93, %p94
      %s96 = ssub.s32 %s31, %s43
      %s97 = ssub.s32 %s32, %s39
      %s98 = sor.u32 %s96, %s97
      %p99 = scmp.eq.s32.totalorder %s98, 0
      %s101 = sadd.s32 %s100, 1
      %s102 = scalar_select %p99, %s100, %s101
      %p105 = pneg %p99
      %p106 = scmp.eq.s32.totalorder %s24, 15
      %p107 = por %p105, %p106
      %p108 = scmp.ne.s32.totalorder %s100, %s103
      %p109 = scmp.eq.s32.totalorder %s24, 0
      %p110 = por %p108, %p109
      %p111 = scmp.ne.s32.totalorder %s100, %s103
      %p112 = scmp.eq.s32.totalorder %s29, 15
      %p113 = por %p111, %p112
      %p114 = scmp.ne.s32.totalorder %s103, %s104
      %p115 = scmp.eq.s32.totalorder %s29, 0
      %p116 = por %p114, %p115
      %p117 = scmp.ne.s32.totalorder %s103, %s104
      %p118 = scmp.eq.s32.totalorder %s30, 15
      %p119 = por %p117, %p118
      %p121 = scmp.ne.s32.totalorder %s104, %s120
      %p122 = scmp.eq.s32.totalorder %s30, 0
      %p123 = por %p121, %p122
      %p124 = scmp.le.s32.totalorder 1, %s24
      %p125 = scmp.lt.s32.totalorder %s24, 17
      %p126 = pnand %p124, %p125
      %p127 = pneg %p126
      // Predicated region
      $region9: #{tpu_custom_call.1} parent=5 // pred_check
        _
      $region10: #{tpu_custom_call.1} parent=5 // pred_check_branch
        %129 = sbr.rel (%p126) target = $region12
      $region11: #{tpu_custom_call.1} parent=5 // pred_region
        %s130 = ssub.s32 %s24, 1
        // Predicated region
        $region13: #{tpu_custom_call.1} parent=11 // pred_check
          %p131 = pneg %p62
        $region14: #{tpu_custom_call.1} parent=11 // pred_check_branch
          %133 = sbr.rel (%p131) target = $region16
        $region15: #{tpu_custom_call.1} parent=11 // pred_region
          %135 = vsyncadd [#allocation5], 0
          %s136 = smul.addr %s34, 4
          %s137 = scalar_lea.hbm %s1, %s136
          %s139 = sshll.u32 %s137, 4
          %s140 = int_to_ptr.hbm [resolvable:$true] %s139
          %s141 = sshll.u32 [#allocation4], 4
          %s142 = int_to_ptr.vmem [resolvable:$true] %s141
          %144 = dma.hbm_to_vmem [thread:$0]  %s140, 64, %s142, [#allocation5]
        $region16: #{tpu_custom_call.1} parent=11 // pred_fallthru
          _
      $region12: #{tpu_custom_call.1} parent=5 // pred_fallthru
        _
      %p145 = scmp.lt.s32.totalorder %s24, 16
      // Predicated region
      $region17: #{tpu_custom_call.1} parent=5 // pred_check
        %p146 = pneg %p145
      $region18: #{tpu_custom_call.1} parent=5 // pred_check_branch
        %148 = sbr.rel (%p146) target = $region20
      $region19: #{tpu_custom_call.1} parent=5 // pred_region
        // Predicated region
        $region21: #{tpu_custom_call.1} parent=19 // pred_check
          %p149 = pneg %p82
        $region22: #{tpu_custom_call.1} parent=19 // pred_check_branch
          %151 = sbr.rel (%p149) target = $region24
        $region23: #{tpu_custom_call.1} parent=19 // pred_region
          %s152 = sand.u32 %s72, 1
          %s153 = scalar_lea.sflag [#allocation8], %s152
          %s154 = sand.u32 %s72, 1
          %s155 = smul.addr %s154, 256
          %s156 = scalar_lea.vmem [#allocation7], %s155
          %158 = vsyncadd %s153, 0
          %s159 = smul.addr %s31, 32
          %s160 = smul.addr %s159, 8
          %s161 = scalar_lea.hbm %s2, %s160
          %s162 = sshll.u32 %s161, 4
          %s163 = int_to_ptr.hbm [resolvable:$true] %s162
          %s164 = sshll.u32 %s156, 4
          %s165 = int_to_ptr.vmem [resolvable:$true] %s164
          %170 = dma.hbm_to_vmem [thread:$0]  %s163, 4096, %s165, %s153, 128, 128, 8
        $region24: #{tpu_custom_call.1} parent=19 // pred_fallthru
          _
      $region20: #{tpu_custom_call.1} parent=5 // pred_fallthru
        _
      %p171 = scmp.le.s32.totalorder 1, %s24
      %p172 = scmp.lt.s32.totalorder %s24, 17
      %p173 = pnand %p171, %p172
      %p174 = pneg %p173
      // Predicated region
      $region25: #{tpu_custom_call.1} parent=5 // pred_check
        _
      $region26: #{tpu_custom_call.1} parent=5 // pred_check_branch
        %176 = sbr.rel (%p173) target = $region28
      $region27: #{tpu_custom_call.1} parent=5 // pred_region
        %s177 = ssub.s32 %s24, 1
        // Predicated region
        $region29: #{tpu_custom_call.1} parent=27 // pred_check
          %p178 = pneg %p62
        $region30: #{tpu_custom_call.1} parent=27 // pred_check_branch
          %180 = sbr.rel (%p178) target = $region32
        $region31: #{tpu_custom_call.1} parent=27 // pred_region
          %182 = dma.done [#allocation5], 64
        $region32: #{tpu_custom_call.1} parent=27 // pred_fallthru
          _
        %s183 = sand.u32 %s75, 1
        %s184 = scalar_lea.sflag [#allocation8], %s183
        %s185 = sand.u32 %s75, 1
        %s186 = smul.addr %s185, 256
        %s187 = scalar_lea.vmem [#allocation7], %s186
        // Predicated region
        $region33: #{tpu_custom_call.1} parent=27 // pred_check
          %p188 = pneg %p88
        $region34: #{tpu_custom_call.1} parent=27 // pred_check_branch
          %190 = sbr.rel (%p188) target = $region36
        $region35: #{tpu_custom_call.1} parent=27 // pred_region
          %192 = dma.done %s184, 4096
        $region36: #{tpu_custom_call.1} parent=27 // pred_fallthru
          _
        %p193 = pneg %p62
        %p194 = pneg %p59
        %s195 = sand.u32 %s75, 1
        %s196 = scalar_lea.sflag [#allocation8], %s195
        %s197 = sand.u32 %s75, 1
        %s198 = smul.addr %s197, 256
        %s199 = scalar_lea.vmem [#allocation7], %s198
        %p200 = pneg %p88
        %p201 = pneg %p85
        %p202 = pneg %p116
        %p203 = pneg %p113
        %s204 = sand.u32 %s103, 1
        %s205 = scalar_lea.sflag [#allocation6], %s204
        %s206 = sand.u32 %s103, 1
        %s207 = smul.addr %s206, 2
        %s208 = scalar_lea.vmem [#allocation9], %s207
        %s209 = sld [smem:[#allocation3 + %s33]]
        %s210 = scvt.s32.f32 %s209
        %v211 = vld [vmem:[#allocation4] sm:$0x7]
        %v212 = vmax.f32 %v211, 0.0
        %v213 = vmin.f32 %v212, 1.0
        %v214 = vstv %s210
        %v215 = vmul.f32 %v213, %v214
        %v216 = vfloor.f32 %v215
        %v217 = vcvt.f32.s32.to.zero.pseudo %v216
        %v218 = vadd.s32 %v217, 1
        %vm219 = vcmp.gt.s32.totalorder %v218, 0
        %v220 = vsel %vm219, %v218, 0
        %v221 = vstv %s209
        %vm222 = vcmp.lt.s32.totalorder %v221, %v220
        %v223 = vsel %vm222, %v221, %v220
        %vm224 = vcmp.gt.s32.totalorder %v217, 0
        %v225 = vsel %vm224, %v217, 0
        %vm226 = vcmp.lt.s32.totalorder %v221, %v225
        %v227 = vsel %vm226, %v221, %v225
        %v228 = vcvt.s32.f32 %v227
        %v229 = vsub.f32 %v215, %v228
        %v230 = vmul.u32 %v227, 73856093
        %v231 = vmul.u32 %v227, 19349663
        %v232 = vrot.slane %v231, 1
        %v233 = vadd.s32 %v230, %v232
        %v234 = vmul.u32 %v227, 83492791
        %v235 = vrot.slane %v234, 2
        %v236 = vadd.s32 %v233, %v235
        %v237 = vand.u32 %v236, 4095
        %v238 = vmul.u32 %v223, 83492791
        %v239 = vrot.slane %v238, 2
        %v240 = vadd.s32 %v233, %v239
        %v241 = vand.u32 %v240, 4095
        %v242 = vmul.u32 %v223, 19349663
        %v243 = vrot.slane %v242, 1
        %v244 = vadd.s32 %v230, %v243
        %v245 = vadd.s32 %v244, %v235
        %v246 = vand.u32 %v245, 4095
        %v247 = vadd.s32 %v244, %v239
        %v248 = vand.u32 %v247, 4095
        %v249 = vmul.u32 %v223, 73856093
        %v250 = vadd.s32 %v249, %v232
        %v251 = vadd.s32 %v250, %v235
        %v252 = vand.u32 %v251, 4095
        %v253 = vadd.s32 %v250, %v239
        %v254 = vand.u32 %v253, 4095
        %v255 = vadd.s32 %v249, %v243
        %v256 = vadd.s32 %v255, %v235
        %v257 = vand.u32 %v256, 4095
        %v258 = vadd.s32 %v255, %v239
        %v259 = vand.u32 %v258, 4095
        %v260 = vsub.f32 1.0, %v229
        %v262 = vrot.slane %v260, 1
        %v264 = vmul.f32 %v260, %v262
        %v265 = vrot.slane %v260, 2
        %v267 = vmul.f32 %v264, %v265
        %v268 = vmul.f32 %v229, %v262
        %v269 = vmul.f32 %v268, %v265
        %v271 = vrot.slane %v229, 1
        %v273 = vmul.f32 %v260, %v271
        %v274 = vmul.f32 %v273, %v265
        %v275 = vmul.f32 %v229, %v271
        %v276 = vmul.f32 %v275, %v265
        %v277 = vrot.slane %v229, 2
        %v279 = vmul.f32 %v264, %v277
        %v280 = vmul.f32 %v268, %v277
        %v281 = vmul.f32 %v273, %v277
        %v282 = vmul.f32 %v275, %v277
        %v283 = vlaneseq
        %v284 = vshrl.u32 %v283, 7
        %v285 = vadd.s32 %v284, 8
        %v286 = vadd.s32 %v284, 16
        %v287 = vadd.s32 %v284, 24
        %v288 = vadd.s32 %v284, 32
        %v289 = vadd.s32 %v284, 40
        %v290 = vadd.s32 %v284, 48
        %v291 = vadd.s32 %v284, 56
        %v292 = vadd.s32 %v284, 64
        %v293 = vadd.s32 %v284, 72
        %v294 = vadd.s32 %v284, 80
        %v295 = vadd.s32 %v284, 88
        %v296 = vadd.s32 %v284, 96
        %v297 = vadd.s32 %v284, 104
        %v298 = vadd.s32 %v284, 112
        %v299 = vadd.s32 %v284, 120
        loop: start=0, step=1, limit=32
        $region37: #{tpu_custom_call.1} parent=27 // loop_pre_header
          _
        $region38: #{tpu_custom_call.1} parent=27 // loop_header
          %s301 = sphi 0, %s305
          %p302 = scmp.ge.s32.totalorder %s301, 32
          %v306 = vphi 0.0, %v740
        $region39: #{tpu_custom_call.1} parent=27 // loop_header_branch
          %304 = sbr.rel (%p302) target = $region43
        $region40: #{tpu_custom_call.1} parent=27 // loop_body
          %s307 = smul.u32 %s301, 128
          %v308 = vstv %s307
          %v309 = vsub.s32 %v237, %v308
          %v310 = vperm.slane %v309, 0
          %vm311 = vcmp.eq.s32.totalorder %v284, %v310
          %vm312 = vcmp.eq.s32.totalorder %v285, %v310
          %vm313 = vcmp.eq.s32.totalorder %v286, %v310
          %vm314 = vcmp.eq.s32.totalorder %v287, %v310
          %vm315 = vcmp.eq.s32.totalorder %v288, %v310
          %vm316 = vcmp.eq.s32.totalorder %v289, %v310
          %vm317 = vcmp.eq.s32.totalorder %v290, %v310
          %vm318 = vcmp.eq.s32.totalorder %v291, %v310
          %vm319 = vcmp.eq.s32.totalorder %v292, %v310
          %vm320 = vcmp.eq.s32.totalorder %v293, %v310
          %vm321 = vcmp.eq.s32.totalorder %v294, %v310
          %vm322 = vcmp.eq.s32.totalorder %v295, %v310
          %vm323 = vcmp.eq.s32.totalorder %v296, %v310
          %vm324 = vcmp.eq.s32.totalorder %v297, %v310
          %vm325 = vcmp.eq.s32.totalorder %v298, %v310
          %vm326 = vcmp.eq.s32.totalorder %v299, %v310
          %v327 = vperm.slane %v267, 0
          %v328 = vsel %vm311, %v327, 0.0
          %v329 = vsel %vm312, %v327, 0.0
          %v330 = vsel %vm313, %v327, 0.0
          %v331 = vsel %vm314, %v327, 0.0
          %v332 = vsel %vm315, %v327, 0.0
          %v333 = vsel %vm316, %v327, 0.0
          %v334 = vsel %vm317, %v327, 0.0
          %v335 = vsel %vm318, %v327, 0.0
          %v336 = vsel %vm319, %v327, 0.0
          %v337 = vsel %vm320, %v327, 0.0
          %v338 = vsel %vm321, %v327, 0.0
          %v339 = vsel %vm322, %v327, 0.0
          %v340 = vsel %vm323, %v327, 0.0
          %v341 = vsel %vm324, %v327, 0.0
          %v342 = vsel %vm325, %v327, 0.0
          %v343 = vsel %vm326, %v327, 0.0
          %v344 = vadd.f32 %v328, 0.0
          %v345 = vadd.f32 %v329, 0.0
          %v346 = vadd.f32 %v330, 0.0
          %v347 = vadd.f32 %v331, 0.0
          %v348 = vadd.f32 %v332, 0.0
          %v349 = vadd.f32 %v333, 0.0
          %v350 = vadd.f32 %v334, 0.0
          %v351 = vadd.f32 %v335, 0.0
          %v352 = vadd.f32 %v336, 0.0
          %v353 = vadd.f32 %v337, 0.0
          %v354 = vadd.f32 %v338, 0.0
          %v355 = vadd.f32 %v339, 0.0
          %v356 = vadd.f32 %v340, 0.0
          %v357 = vadd.f32 %v341, 0.0
          %v358 = vadd.f32 %v342, 0.0
          %v359 = vadd.f32 %v343, 0.0
          %v360 = vsub.s32 %v241, %v308
          %v361 = vperm.slane %v360, 0
          %vm362 = vcmp.eq.s32.totalorder %v284, %v361
          %vm363 = vcmp.eq.s32.totalorder %v285, %v361
          %vm364 = vcmp.eq.s32.totalorder %v286, %v361
          %vm365 = vcmp.eq.s32.totalorder %v287, %v361
          %vm366 = vcmp.eq.s32.totalorder %v288, %v361
          %vm367 = vcmp.eq.s32.totalorder %v289, %v361
          %vm368 = vcmp.eq.s32.totalorder %v290, %v361
          %vm369 = vcmp.eq.s32.totalorder %v291, %v361
          %vm370 = vcmp.eq.s32.totalorder %v292, %v361
          %vm371 = vcmp.eq.s32.totalorder %v293, %v361
          %vm372 = vcmp.eq.s32.totalorder %v294, %v361
          %vm373 = vcmp.eq.s32.totalorder %v295, %v361
          %vm374 = vcmp.eq.s32.totalorder %v296, %v361
          %vm375 = vcmp.eq.s32.totalorder %v297, %v361
          %vm376 = vcmp.eq.s32.totalorder %v298, %v361
          %vm377 = vcmp.eq.s32.totalorder %v299, %v361
          %v378 = vperm.slane %v269, 0
          %v379 = vsel %vm362, %v378, 0.0
          %v380 = vsel %vm363, %v378, 0.0
          %v381 = vsel %vm364, %v378, 0.0
          %v382 = vsel %vm365, %v378, 0.0
          %v383 = vsel %vm366, %v378, 0.0
          %v384 = vsel %vm367, %v378, 0.0
          %v385 = vsel %vm368, %v378, 0.0
          %v386 = vsel %vm369, %v378, 0.0
          %v387 = vsel %vm370, %v378, 0.0
          %v388 = vsel %vm371, %v378, 0.0
          %v389 = vsel %vm372, %v378, 0.0
          %v390 = vsel %vm373, %v378, 0.0
          %v391 = vsel %vm374, %v378, 0.0
          %v392 = vsel %vm375, %v378, 0.0
          %v393 = vsel %vm376, %v378, 0.0
          %v394 = vsel %vm377, %v378, 0.0
          %v395 = vadd.f32 %v344, %v379
          %v396 = vadd.f32 %v345, %v380
          %v397 = vadd.f32 %v346, %v381
          %v398 = vadd.f32 %v347, %v382
          %v399 = vadd.f32 %v348, %v383
          %v400 = vadd.f32 %v349, %v384
          %v401 = vadd.f32 %v350, %v385
          %v402 = vadd.f32 %v351, %v386
          %v403 = vadd.f32 %v352, %v387
          %v404 = vadd.f32 %v353, %v388
          %v405 = vadd.f32 %v354, %v389
          %v406 = vadd.f32 %v355, %v390
          %v407 = vadd.f32 %v356, %v391
          %v408 = vadd.f32 %v357, %v392
          %v409 = vadd.f32 %v358, %v393
          %v410 = vadd.f32 %v359, %v394
          %v411 = vsub.s32 %v246, %v308
          %v412 = vperm.slane %v411, 0
          %vm413 = vcmp.eq.s32.totalorder %v284, %v412
          %vm414 = vcmp.eq.s32.totalorder %v285, %v412
          %vm415 = vcmp.eq.s32.totalorder %v286, %v412
          %vm416 = vcmp.eq.s32.totalorder %v287, %v412
          %vm417 = vcmp.eq.s32.totalorder %v288, %v412
          %vm418 = vcmp.eq.s32.totalorder %v289, %v412
          %vm419 = vcmp.eq.s32.totalorder %v290, %v412
          %vm420 = vcmp.eq.s32.totalorder %v291, %v412
          %vm421 = vcmp.eq.s32.totalorder %v292, %v412
          %vm422 = vcmp.eq.s32.totalorder %v293, %v412
          %vm423 = vcmp.eq.s32.totalorder %v294, %v412
          %vm424 = vcmp.eq.s32.totalorder %v295, %v412
          %vm425 = vcmp.eq.s32.totalorder %v296, %v412
          %vm426 = vcmp.eq.s32.totalorder %v297, %v412
          %vm427 = vcmp.eq.s32.totalorder %v298, %v412
          %vm428 = vcmp.eq.s32.totalorder %v299, %v412
          %v429 = vperm.slane %v274, 0
          %v430 = vsel %vm413, %v429, 0.0
          %v431 = vsel %vm414, %v429, 0.0
          %v432 = vsel %vm415, %v429, 0.0
          %v433 = vsel %vm416, %v429, 0.0
          %v434 = vsel %vm417, %v429, 0.0
          %v435 = vsel %vm418, %v429, 0.0
          %v436 = vsel %vm419, %v429, 0.0
          %v437 = vsel %vm420, %v429, 0.0
          %v438 = vsel %vm421, %v429, 0.0
          %v439 = vsel %vm422, %v429, 0.0
          %v440 = vsel %vm423, %v429, 0.0
          %v441 = vsel %vm424, %v429, 0.0
          %v442 = vsel %vm425, %v429, 0.0
          %v443 = vsel %vm426, %v429, 0.0
          %v444 = vsel %vm427, %v429, 0.0
          %v445 = vsel %vm428, %v429, 0.0
          %v446 = vadd.f32 %v395, %v430
          %v447 = vadd.f32 %v396, %v431
          %v448 = vadd.f32 %v397, %v432
          %v449 = vadd.f32 %v398, %v433
          %v450 = vadd.f32 %v399, %v434
          %v451 = vadd.f32 %v400, %v435
          %v452 = vadd.f32 %v401, %v436
          %v453 = vadd.f32 %v402, %v437
          %v454 = vadd.f32 %v403, %v438
          %v455 = vadd.f32 %v404, %v439
          %v456 = vadd.f32 %v405, %v440
          %v457 = vadd.f32 %v406, %v441
          %v458 = vadd.f32 %v407, %v442
          %v459 = vadd.f32 %v408, %v443
          %v460 = vadd.f32 %v409, %v444
          %v461 = vadd.f32 %v410, %v445
          %v462 = vsub.s32 %v248, %v308
          %v463 = vperm.slane %v462, 0
          %vm464 = vcmp.eq.s32.totalorder %v284, %v463
          %vm465 = vcmp.eq.s32.totalorder %v285, %v463
          %vm466 = vcmp.eq.s32.totalorder %v286, %v463
          %vm467 = vcmp.eq.s32.totalorder %v287, %v463
          %vm468 = vcmp.eq.s32.totalorder %v288, %v463
          %vm469 = vcmp.eq.s32.totalorder %v289, %v463
          %vm470 = vcmp.eq.s32.totalorder %v290, %v463
          %vm471 = vcmp.eq.s32.totalorder %v291, %v463
          %vm472 = vcmp.eq.s32.totalorder %v292, %v463
          %vm473 = vcmp.eq.s32.totalorder %v293, %v463
          %vm474 = vcmp.eq.s32.totalorder %v294, %v463
          %vm475 = vcmp.eq.s32.totalorder %v295, %v463
          %vm476 = vcmp.eq.s32.totalorder %v296, %v463
          %vm477 = vcmp.eq.s32.totalorder %v297, %v463
          %vm478 = vcmp.eq.s32.totalorder %v298, %v463
          %vm479 = vcmp.eq.s32.totalorder %v299, %v463
          %v480 = vperm.slane %v276, 0
          %v481 = vsel %vm464, %v480, 0.0
          %v482 = vsel %vm465, %v480, 0.0
          %v483 = vsel %vm466, %v480, 0.0
          %v484 = vsel %vm467, %v480, 0.0
          %v485 = vsel %vm468, %v480, 0.0
          %v486 = vsel %vm469, %v480, 0.0
          %v487 = vsel %vm470, %v480, 0.0
          %v488 = vsel %vm471, %v480, 0.0
          %v489 = vsel %vm472, %v480, 0.0
          %v490 = vsel %vm473, %v480, 0.0
          %v491 = vsel %vm474, %v480, 0.0
          %v492 = vsel %vm475, %v480, 0.0
          %v493 = vsel %vm476, %v480, 0.0
          %v494 = vsel %vm477, %v480, 0.0
          %v495 = vsel %vm478, %v480, 0.0
          %v496 = vsel %vm479, %v480, 0.0
          %v497 = vadd.f32 %v446, %v481
          %v498 = vadd.f32 %v447, %v482
          %v499 = vadd.f32 %v448, %v483
          %v500 = vadd.f32 %v449, %v484
          %v501 = vadd.f32 %v450, %v485
          %v502 = vadd.f32 %v451, %v486
          %v503 = vadd.f32 %v452, %v487
          %v504 = vadd.f32 %v453, %v488
          %v505 = vadd.f32 %v454, %v489
          %v506 = vadd.f32 %v455, %v490
          %v507 = vadd.f32 %v456, %v491
          %v508 = vadd.f32 %v457, %v492
          %v509 = vadd.f32 %v458, %v493
          %v510 = vadd.f32 %v459, %v494
          %v511 = vadd.f32 %v460, %v495
          %v512 = vadd.f32 %v461, %v496
          %v513 = vsub.s32 %v252, %v308
          %v514 = vperm.slane %v513, 0
          %vm515 = vcmp.eq.s32.totalorder %v284, %v514
          %vm516 = vcmp.eq.s32.totalorder %v285, %v514
          %vm517 = vcmp.eq.s32.totalorder %v286, %v514
          %vm518 = vcmp.eq.s32.totalorder %v287, %v514
          %vm519 = vcmp.eq.s32.totalorder %v288, %v514
          %vm520 = vcmp.eq.s32.totalorder %v289, %v514
          %vm521 = vcmp.eq.s32.totalorder %v290, %v514
          %vm522 = vcmp.eq.s32.totalorder %v291, %v514
          %vm523 = vcmp.eq.s32.totalorder %v292, %v514
          %vm524 = vcmp.eq.s32.totalorder %v293, %v514
          %vm525 = vcmp.eq.s32.totalorder %v294, %v514
          %vm526 = vcmp.eq.s32.totalorder %v295, %v514
          %vm527 = vcmp.eq.s32.totalorder %v296, %v514
          %vm528 = vcmp.eq.s32.totalorder %v297, %v514
          %vm529 = vcmp.eq.s32.totalorder %v298, %v514
          %vm530 = vcmp.eq.s32.totalorder %v299, %v514
          %v531 = vperm.slane %v279, 0
          %v532 = vsel %vm515, %v531, 0.0
          %v533 = vsel %vm516, %v531, 0.0
          %v534 = vsel %vm517, %v531, 0.0
          %v535 = vsel %vm518, %v531, 0.0
          %v536 = vsel %vm519, %v531, 0.0
          %v537 = vsel %vm520, %v531, 0.0
          %v538 = vsel %vm521, %v531, 0.0
          %v539 = vsel %vm522, %v531, 0.0
          %v540 = vsel %vm523, %v531, 0.0
          %v541 = vsel %vm524, %v531, 0.0
          %v542 = vsel %vm525, %v531, 0.0
          %v543 = vsel %vm526, %v531, 0.0
          %v544 = vsel %vm527, %v531, 0.0
          %v545 = vsel %vm528, %v531, 0.0
          %v546 = vsel %vm529, %v531, 0.0
          %v547 = vsel %vm530, %v531, 0.0
          %v548 = vadd.f32 %v497, %v532
          %v549 = vadd.f32 %v498, %v533
          %v550 = vadd.f32 %v499, %v534
          %v551 = vadd.f32 %v500, %v535
          %v552 = vadd.f32 %v501, %v536
          %v553 = vadd.f32 %v502, %v537
          %v554 = vadd.f32 %v503, %v538
          %v555 = vadd.f32 %v504, %v539
          %v556 = vadd.f32 %v505, %v540
          %v557 = vadd.f32 %v506, %v541
          %v558 = vadd.f32 %v507, %v542
          %v559 = vadd.f32 %v508, %v543
          %v560 = vadd.f32 %v509, %v544
          %v561 = vadd.f32 %v510, %v545
          %v562 = vadd.f32 %v511, %v546
          %v563 = vadd.f32 %v512, %v547
          %v564 = vsub.s32 %v254, %v308
          %v565 = vperm.slane %v564, 0
          %vm566 = vcmp.eq.s32.totalorder %v284, %v565
          %vm567 = vcmp.eq.s32.totalorder %v285, %v565
          %vm568 = vcmp.eq.s32.totalorder %v286, %v565
          %vm569 = vcmp.eq.s32.totalorder %v287, %v565
          %vm570 = vcmp.eq.s32.totalorder %v288, %v565
          %vm571 = vcmp.eq.s32.totalorder %v289, %v565
          %vm572 = vcmp.eq.s32.totalorder %v290, %v565
          %vm573 = vcmp.eq.s32.totalorder %v291, %v565
          %vm574 = vcmp.eq.s32.totalorder %v292, %v565
          %vm575 = vcmp.eq.s32.totalorder %v293, %v565
          %vm576 = vcmp.eq.s32.totalorder %v294, %v565
          %vm577 = vcmp.eq.s32.totalorder %v295, %v565
          %vm578 = vcmp.eq.s32.totalorder %v296, %v565
          %vm579 = vcmp.eq.s32.totalorder %v297, %v565
          %vm580 = vcmp.eq.s32.totalorder %v298, %v565
          %vm581 = vcmp.eq.s32.totalorder %v299, %v565
          %v582 = vperm.slane %v280, 0
          %v583 = vsel %vm566, %v582, 0.0
          %v584 = vsel %vm567, %v582, 0.0
          %v585 = vsel %vm568, %v582, 0.0
          %v586 = vsel %vm569, %v582, 0.0
          %v587 = vsel %vm570, %v582, 0.0
          %v588 = vsel %vm571, %v582, 0.0
          %v589 = vsel %vm572, %v582, 0.0
          %v590 = vsel %vm573, %v582, 0.0
          %v591 = vsel %vm574, %v582, 0.0
          %v592 = vsel %vm575, %v582, 0.0
          %v593 = vsel %vm576, %v582, 0.0
          %v594 = vsel %vm577, %v582, 0.0
          %v595 = vsel %vm578, %v582, 0.0
          %v596 = vsel %vm579, %v582, 0.0
          %v597 = vsel %vm580, %v582, 0.0
          %v598 = vsel %vm581, %v582, 0.0
          %v599 = vadd.f32 %v548, %v583
          %v600 = vadd.f32 %v549, %v584
          %v601 = vadd.f32 %v550, %v585
          %v602 = vadd.f32 %v551, %v586
          %v603 = vadd.f32 %v552, %v587
          %v604 = vadd.f32 %v553, %v588
          %v605 = vadd.f32 %v554, %v589
          %v606 = vadd.f32 %v555, %v590
          %v607 = vadd.f32 %v556, %v591
          %v608 = vadd.f32 %v557, %v592
          %v609 = vadd.f32 %v558, %v593
          %v610 = vadd.f32 %v559, %v594
          %v611 = vadd.f32 %v560, %v595
          %v612 = vadd.f32 %v561, %v596
          %v613 = vadd.f32 %v562, %v597
          %v614 = vadd.f32 %v563, %v598
          %v615 = vsub.s32 %v257, %v308
          %v616 = vperm.slane %v615, 0
          %vm617 = vcmp.eq.s32.totalorder %v284, %v616
          %vm618 = vcmp.eq.s32.totalorder %v285, %v616
          %vm619 = vcmp.eq.s32.totalorder %v286, %v616
          %vm620 = vcmp.eq.s32.totalorder %v287, %v616
          %vm621 = vcmp.eq.s32.totalorder %v288, %v616
          %vm622 = vcmp.eq.s32.totalorder %v289, %v616
          %vm623 = vcmp.eq.s32.totalorder %v290, %v616
          %vm624 = vcmp.eq.s32.totalorder %v291, %v616
          %vm625 = vcmp.eq.s32.totalorder %v292, %v616
          %vm626 = vcmp.eq.s32.totalorder %v293, %v616
          %vm627 = vcmp.eq.s32.totalorder %v294, %v616
          %vm628 = vcmp.eq.s32.totalorder %v295, %v616
          %vm629 = vcmp.eq.s32.totalorder %v296, %v616
          %vm630 = vcmp.eq.s32.totalorder %v297, %v616
          %vm631 = vcmp.eq.s32.totalorder %v298, %v616
          %vm632 = vcmp.eq.s32.totalorder %v299, %v616
          %v633 = vperm.slane %v281, 0
          %v634 = vsel %vm617, %v633, 0.0
          %v635 = vsel %vm618, %v633, 0.0
          %v636 = vsel %vm619, %v633, 0.0
          %v637 = vsel %vm620, %v633, 0.0
          %v638 = vsel %vm621, %v633, 0.0
          %v639 = vsel %vm622, %v633, 0.0
          %v640 = vsel %vm623, %v633, 0.0
          %v641 = vsel %vm624, %v633, 0.0
          %v642 = vsel %vm625, %v633, 0.0
          %v643 = vsel %vm626, %v633, 0.0
          %v644 = vsel %vm627, %v633, 0.0
          %v645 = vsel %vm628, %v633, 0.0
          %v646 = vsel %vm629, %v633, 0.0
          %v647 = vsel %vm630, %v633, 0.0
          %v648 = vsel %vm631, %v633, 0.0
          %v649 = vsel %vm632, %v633, 0.0
          %v650 = vadd.f32 %v599, %v634
          %v651 = vadd.f32 %v600, %v635
          %v652 = vadd.f32 %v601, %v636
          %v653 = vadd.f32 %v602, %v637
          %v654 = vadd.f32 %v603, %v638
          %v655 = vadd.f32 %v604, %v639
          %v656 = vadd.f32 %v605, %v640
          %v657 = vadd.f32 %v606, %v641
          %v658 = vadd.f32 %v607, %v642
          %v659 = vadd.f32 %v608, %v643
          %v660 = vadd.f32 %v609, %v644
          %v661 = vadd.f32 %v610, %v645
          %v662 = vadd.f32 %v611, %v646
          %v663 = vadd.f32 %v612, %v647
          %v664 = vadd.f32 %v613, %v648
          %v665 = vadd.f32 %v614, %v649
          %v666 = vsub.s32 %v259, %v308
          %v667 = vperm.slane %v666, 0
          %vm668 = vcmp.eq.s32.totalorder %v284, %v667
          %vm669 = vcmp.eq.s32.totalorder %v285, %v667
          %vm670 = vcmp.eq.s32.totalorder %v286, %v667
          %vm671 = vcmp.eq.s32.totalorder %v287, %v667
          %vm672 = vcmp.eq.s32.totalorder %v288, %v667
          %vm673 = vcmp.eq.s32.totalorder %v289, %v667
          %vm674 = vcmp.eq.s32.totalorder %v290, %v667
          %vm675 = vcmp.eq.s32.totalorder %v291, %v667
          %vm676 = vcmp.eq.s32.totalorder %v292, %v667
          %vm677 = vcmp.eq.s32.totalorder %v293, %v667
          %vm678 = vcmp.eq.s32.totalorder %v294, %v667
          %vm679 = vcmp.eq.s32.totalorder %v295, %v667
          %vm680 = vcmp.eq.s32.totalorder %v296, %v667
          %vm681 = vcmp.eq.s32.totalorder %v297, %v667
          %vm682 = vcmp.eq.s32.totalorder %v298, %v667
          %vm683 = vcmp.eq.s32.totalorder %v299, %v667
          %v684 = vperm.slane %v282, 0
          %v685 = vsel %vm668, %v684, 0.0
          %v686 = vsel %vm669, %v684, 0.0
          %v687 = vsel %vm670, %v684, 0.0
          %v688 = vsel %vm671, %v684, 0.0
          %v689 = vsel %vm672, %v684, 0.0
          %v690 = vsel %vm673, %v684, 0.0
          %v691 = vsel %vm674, %v684, 0.0
          %v692 = vsel %vm675, %v684, 0.0
          %v693 = vsel %vm676, %v684, 0.0
          %v694 = vsel %vm677, %v684, 0.0
          %v695 = vsel %vm678, %v684, 0.0
          %v696 = vsel %vm679, %v684, 0.0
          %v697 = vsel %vm680, %v684, 0.0
          %v698 = vsel %vm681, %v684, 0.0
          %v699 = vsel %vm682, %v684, 0.0
          %v700 = vsel %vm683, %v684, 0.0
          %v701 = vadd.f32 %v650, %v685
          %v702 = vadd.f32 %v651, %v686
          %v703 = vadd.f32 %v652, %v687
          %v704 = vadd.f32 %v653, %v688
          %v705 = vadd.f32 %v654, %v689
          %v706 = vadd.f32 %v655, %v690
          %v707 = vadd.f32 %v656, %v691
          %v708 = vadd.f32 %v657, %v692
          %v709 = vadd.f32 %v658, %v693
          %v710 = vadd.f32 %v659, %v694
          %v711 = vadd.f32 %v660, %v695
          %v712 = vadd.f32 %v661, %v696
          %v713 = vadd.f32 %v662, %v697
          %v714 = vadd.f32 %v663, %v698
          %v715 = vadd.f32 %v664, %v699
          %v716 = vadd.f32 %v665, %v700
          %s717 = smul.u32 %s301, 8
          %s718 = scalar_lea.vmem %s187, %s717 [#allocation7]
          %v719 = vld [vmem:[%s718] sm:$0xff]
          %720 = vmatpush.msra.mxu0 %v716
          %721 = vmatpush.msra.mxu0 %v715
          %722 = vmatpush.msra.mxu0 %v714
          %723 = vmatpush.msra.mxu0 %v713
          %724 = vmatpush.msra.mxu0 %v712
          %725 = vmatpush.msra.mxu0 %v711
          %726 = vmatpush.msra.mxu0 %v710
          %727 = vmatpush.msra.mxu0 %v709
          %728 = vmatpush.msra.mxu0 %v708
          %729 = vmatpush.msra.mxu0 %v707
          %730 = vmatpush.msra.mxu0 %v706
          %731 = vmatpush.msra.mxu0 %v705
          %732 = vmatpush.msra.mxu0 %v704
          %733 = vmatpush.msra.mxu0 %v703
          %734 = vmatpush.msra.mxu0 %v702
          %735 = vmatpush.msra.mxu0 %v701
          %736 = vmatmul.f32.gmra.mxu0 %v719
          %v737 = vpop.f32.mrf.mxu0
          %v738 = vadd.f32 0.0, %v737
          %739 = vdwg.mxu0
          %v740 = vadd.f32 %v306, %v738
        $region41: #{tpu_custom_call.1} parent=27 // loop_footer
          %s305 = sadd.s32 1, %s301
        $region42: #{tpu_custom_call.1} parent=27 // loop_footer_branch
          %300 = sbr.rel target = $region38
        $region43: #{tpu_custom_call.1} parent=27 // loop_exit
          _
        %741 = vst [vmem:[%s208] sm:$0x3] %v306
        %s742 = sand.u32 %s103, 1
        %s743 = scalar_lea.sflag [#allocation6], %s742
        %s744 = sand.u32 %s103, 1
        %s745 = smul.addr %s744, 2
        %s746 = scalar_lea.vmem [#allocation9], %s745
        // Predicated region
        $region44: #{tpu_custom_call.1} parent=27 // pred_check
          %p747 = pneg %p113
        $region45: #{tpu_custom_call.1} parent=27 // pred_check_branch
          %749 = sbr.rel (%p747) target = $region47
        $region46: #{tpu_custom_call.1} parent=27 // pred_region
          %751 = vsyncadd %s743, 0
          %s752 = sadd.s32 %s34, %s33
          %s753 = smul.addr %s752, 2
          %s754 = scalar_lea.hbm %s3, %s753
          %s756 = sshll.u32 %s746, 4
          %s757 = int_to_ptr.vmem [resolvable:$true] %s756
          %s758 = sshll.u32 %s754, 4
          %s759 = int_to_ptr.hbm [resolvable:$true] %s758
          %761 = dma.vmem_to_hbm [thread:$0]  %s757, 32, %s759, %s743
        $region47: #{tpu_custom_call.1} parent=27 // pred_fallthru
          _
      $region28: #{tpu_custom_call.1} parent=5 // pred_fallthru
        _
      %p762 = scmp.le.s32.totalorder 2, %s24
      // Predicated region
      $region48: #{tpu_custom_call.1} parent=5 // pred_check
        %p763 = pneg %p762
      $region49: #{tpu_custom_call.1} parent=5 // pred_check_branch
        %765 = sbr.rel (%p763) target = $region51
      $region50: #{tpu_custom_call.1} parent=5 // pred_region
        %s766 = ssub.s32 %s24, 2
        // Predicated region
        $region52: #{tpu_custom_call.1} parent=50 // pred_check
          %p767 = pneg %p119
        $region53: #{tpu_custom_call.1} parent=50 // pred_check_branch
          %769 = sbr.rel (%p767) target = $region55
        $region54: #{tpu_custom_call.1} parent=50 // pred_region
          %s770 = sand.u32 %s104, 1
          %s771 = scalar_lea.sflag [#allocation6], %s770
          %s772 = sand.u32 %s104, 1
          %s773 = smul.addr %s772, 2
          %s774 = scalar_lea.vmem [#allocation9], %s773
          %776 = dma.done %s771, 32
        $region55: #{tpu_custom_call.1} parent=50 // pred_fallthru
          _
      $region51: #{tpu_custom_call.1} parent=5 // pred_fallthru
        _
    $region6: #{tpu_custom_call.1} parent=1 // loop_footer
      %s28 = sadd.s32 1, %s24
    $region7: #{tpu_custom_call.1} parent=1 // loop_footer_branch
      %23 = sbr.rel target = $region3
    $region8: #{tpu_custom_call.1} parent=1 // loop_exit
      _
    %777 = vsyncpa [#allocation5], 1
    %s778 = scalar_lea.sflag [#allocation5], 1
    %779 = vsyncpa %s778, 1
    %780 = vsyncpa [#allocation8], 1
    %s781 = scalar_lea.sflag [#allocation8], 1
    %782 = vsyncpa %s781, 1
    %783 = vsyncpa [#allocation6], 1
    %s784 = scalar_lea.sflag [#allocation6], 1
    %785 = vsyncpa %s784, 1

</llo_original>
